<compile_context>
chip_gen: v7x
topology: tpu7x:2x2x1
jax: 0.10.0
libtpu: 0.0.40
codegen_flags: <defaults>
</compile_context>

<pallas_src>
import jax
import jax.numpy as jnp
from jax import lax
from jax.experimental import pallas as pl
from jax.experimental.pallas import tpu as pltpu


def _linear_kernel(x_ref, wt_ref, b_ref, o_ref):
    # x_ref: [B, D], wt_ref: [D, A] (pre-transposed in wrapper), b_ref: [1, A],
    # o_ref: [B, A].  y = x @ W^T + b  ==  x @ wt + b.
    y = lax.dot_general(
        x_ref[...],
        wt_ref[...],
        dimension_numbers=(((1,), (0,)), ((), ())),   # [M,K] x [K,N] -> MXU, no relayout
        preferred_element_type=jnp.float32,
    )
    o_ref[...] = (y + b_ref[...]).astype(o_ref.dtype)


def _forward_gridless(x, wt, bias2d):
    """Single-block path for tiny batches: no grid, no pipeline machinery."""
    batch = x.shape[0]
    action_space = wt.shape[1]
    return pl.pallas_call(
        _linear_kernel,
        out_shape=jax.ShapeDtypeStruct((batch, action_space), x.dtype),
        in_specs=[
            pl.BlockSpec(memory_space=pltpu.MemorySpace.VMEM),
            pl.BlockSpec(memory_space=pltpu.MemorySpace.VMEM),
            pl.BlockSpec(memory_space=pltpu.MemorySpace.VMEM),
        ],
        out_specs=pl.BlockSpec(memory_space=pltpu.MemorySpace.VMEM),
    )(x, wt, bias2d)


def _forward_batched(x, wt, bias2d, tile_b):
    """Large-batch path: tile only the batch axis; weight/bias stay VMEM-resident.

    The batch grid axis is marked "parallel" so it shards across the two
    TensorCores on v7x (no-op on single-TC v5e/v6e).  Caller guarantees
    x.shape[0] % tile_b == 0 and tile_b % 8 == 0.
    """
    batch, input_dim = x.shape
    action_space = wt.shape[1]
    grid = (batch // tile_b,)
    return pl.pallas_call(
        _linear_kernel,
        out_shape=jax.ShapeDtypeStruct((batch, action_space), x.dtype),
        grid=grid,
        in_specs=[
            pl.BlockSpec((tile_b, input_dim), lambda i: (i, 0)),
            pl.BlockSpec((input_dim, action_space), lambda i: (0, 0)),   # resident
            pl.BlockSpec((1, action_space), lambda i: (0, 0)),           # resident
        ],
        out_specs=pl.BlockSpec((tile_b, action_space), lambda i: (i, 0)),
        compiler_params=pltpu.CompilerParams(
            dimension_semantics=("parallel",),
        ),
    )(x, wt, bias2d)


# --- tile selection ---------------------------------------------------------

_GRIDLESS_MAX_BATCH = 512          # tiny batches: single block, no pipeline
_MIN_TILE = 1024                   # don't bother with smaller pipelined tiles
_MAX_TILE = 32768                  # 32K rows * 128 B (D=32, f32) = 4 MiB x-tile per buffer
_VMEM_BUDGET_BYTES = 12 * 1024 * 1024   # stays under v5e's 16 MiB default scoped VMEM


def _choose_tile(batch, input_dim, action_space, itemsize):
    # Per-row VMEM cost per grid step: double-buffered x tile + double-buffered out tile.
    bytes_per_row = 2 * input_dim * itemsize + 2 * action_space * itemsize
    vmem_cap = max(_VMEM_BUDGET_BYTES // bytes_per_row, 8)
    # Prefer exactly 2 grid steps (both v7x TCs busy) unless that exceeds the caps,
    # in which case more steps are used automatically via cdiv below.
    tile = pl.cdiv(batch, 2)
    tile = min(tile, _MAX_TILE, vmem_cap)
    tile = max(tile, _MIN_TILE)
    tile = ((tile + 7) // 8) * 8                      # sublane (8) alignment
    return int(tile)


def controller_forward(x, weight, bias):
    """Pallas implementation of Controller.forward (nn.Linear).

    x:      [batch, input_dim]            float32
    weight: [action_space, input_dim]     float32 (PyTorch Linear layout)
    bias:   [action_space]                float32
    returns [batch, action_space]         float32
    """
    batch, input_dim = x.shape
    action_space = weight.shape[0]

    # One-time layout prep in XLA (outside the kernel / grid loop):
    wt = weight.T.astype(x.dtype)                     # [D, A] -> clean MXU RHS
    bias2d = bias.reshape(1, action_space).astype(x.dtype)

    if batch <= _GRIDLESS_MAX_BATCH:
        # Tiny batch: pipeline machinery is pure overhead; single VMEM block.
        return _forward_gridless(x, wt, bias2d)

    tile_b = _choose_tile(batch, input_dim, action_space, x.dtype.itemsize)
    num_tiles = pl.cdiv(batch, tile_b)
    padded = int(num_tiles) * tile_b
    if padded != batch:
        x = jnp.pad(x, ((0, padded - batch), (0, 0)))  # zero rows; sliced off below
    out = _forward_batched(x, wt, bias2d, tile_b)
    if padded != batch:
        out = out[:batch]
    return out


if __name__ == "__main__":
    # Small shapes consistent with the module: batch=2, input_dim=32, action_space=8.
    batch, input_dim, action_space = 2, 32, 8

    key = jax.random.PRNGKey(0)
    kx, kw, kb, kx_big = jax.random.split(key, 4)

    x = jax.random.normal(kx, (batch, input_dim), dtype=jnp.float32)
    # Deterministic parameter init (mimicking nn.Linear's uniform bound).
    bound = 1.0 / jnp.sqrt(jnp.float32(input_dim))
    weight = jax.random.uniform(
        kw, (action_space, input_dim), minval=-bound, maxval=bound, dtype=jnp.float32
    )
    bias = jax.random.uniform(
        kb, (action_space,), minval=-bound, maxval=bound, dtype=jnp.float32
    )

    # --- tiny (gridless) path ---
    out = controller_forward(x, weight, bias)
    jax.block_until_ready(out)
    ref = x @ weight.T + bias
    assert out.shape == (batch, action_space)
    assert jnp.allclose(out, ref, atol=1e-5, rtol=1e-5)

    # --- batched (tiled, padded, parallel batch axis) path ---
    # Irregular batch (not a multiple of the tile) exercises the cdiv + pad path.
    big_batch = 2000
    x_big = jax.random.normal(kx_big, (big_batch, input_dim), dtype=jnp.float32)
    out_big = controller_forward(x_big, weight, bias)
    jax.block_until_ready(out_big)
    ref_big = x_big @ weight.T + bias
    assert out_big.shape == (big_batch, action_space)
    assert jnp.allclose(out_big, ref_big, atol=1e-5, rtol=1e-5)

    print("KERNEL_OK")
</pallas_src>

<mosaic_0001>
module attributes {stable_mosaic.version = 11 : i64} {
  func.func @_linear_kernel(%arg0: memref<2x32xf32, #tpu.memory_space<vmem>>, %arg1: memref<32x8xf32, #tpu.memory_space<vmem>>, %arg2: memref<1x8xf32, #tpu.memory_space<vmem>>, %arg3: memref<2x8xf32, #tpu.memory_space<vmem>>) attributes {dimension_semantics = [], scalar_prefetch = 0 : i64, scratch_operands = 0 : i64, tpu.core_type = #tpu.core_type<tc>} {
    %c0 = arith.constant 0 : index
    %c0_0 = arith.constant 0 : index
    %0 = vector.load %arg0[%c0, %c0_0] : memref<2x32xf32, #tpu.memory_space<vmem>>, vector<2x32xf32>
    %c0_1 = arith.constant 0 : index
    %c0_2 = arith.constant 0 : index
    %1 = vector.load %arg1[%c0_1, %c0_2] : memref<32x8xf32, #tpu.memory_space<vmem>>, vector<32x8xf32>
    %cst = arith.constant dense<0.000000e+00> : vector<2x8xf32>
    %2 = tpu.matmul %0, %1, %cst {dimension_numbers = #tpu.dot_dimension_numbers<[1], [0], [0], [1], [0, 0, 1, 1], [], []>} : vector<2x32xf32>, vector<32x8xf32>, vector<2x8xf32> -> vector<2x8xf32>
    %c0_3 = arith.constant 0 : index
    %c0_4 = arith.constant 0 : index
    %3 = vector.load %arg2[%c0_3, %c0_4] : memref<1x8xf32, #tpu.memory_space<vmem>>, vector<1x8xf32>
    %4 = vector.broadcast %3 : vector<1x8xf32> to vector<2x8xf32>
    %5 = arith.addf %2, %4 : vector<2x8xf32>
    %c0_5 = arith.constant 0 : index
    %c0_6 = arith.constant 0 : index
    %6 = vector.load %arg3[%c0_5, %c0_6] : memref<2x8xf32, #tpu.memory_space<vmem>>, vector<2x8xf32>
    tpu.vector_store %arg3[%c0_5, %c0_6], %5 {strides = array<i32>} : memref<2x8xf32, #tpu.memory_space<vmem>>, vector<2x8xf32>,
    return
  }
}

</mosaic_0001>

<llo_original>
// kernel: tpu_custom_call.1
$region0: #{tpu_custom_call.1}
  #allocation0 [shape = 'u32[]', space=smem, size = 0x4, offset = 0x4, fixed_abs, tag = 'smem constant byte address 0x4 - core index']
  #allocation1 [shape = 'u32[144,128]{1,0:T(1,128)}', space=vmem, size = 0x12000, scoped, tag = 'internal scratch']
  %s0 = inlined_call_operand.vmem [shape: f32[2,32], index: 0, kind: input, shape index: {}]
  %s1 = inlined_call_operand.vmem [shape: f32[32,8], index: 1, kind: input, shape index: {}]
  %s2 = inlined_call_operand.vmem [shape: f32[1,8], index: 2, kind: input, shape index: {}]
  %s3 = inlined_call_operand.hbm [shape: f32[2,8], index: 3, kind: output, shape index: {}]
  %s4 = sld [smem:[#allocation0]]
  $region22: #{tpu_custom_call.1} parent=0
    _
  %s6 = ssub.s32 1, %s4
  %s7 = scalar_select 0, %s6, %s4
  $region1: #{tpu_custom_call.1} parent=0
    #allocation2 [shape = 'u8[1024]{0}', space=vmem, size = 0x400, scoped, tag = 'output window, operand 0, single buffered']
    #allocation3 [shape = 's32[1]{0}', space=sflag, size = 0x4, scoped, tag = 'scoped memory for tpu_custom_call.1']
    %8 = vsyncpa [#allocation3], 0
    // Predicated region
    $region2: #{tpu_custom_call.1} parent=1 // pred_check
      _
    $region3: #{tpu_custom_call.1} parent=1 // pred_check_branch
      %10 = sbr.rel (0) target = $region5
    $region4: #{tpu_custom_call.1} parent=1 // pred_region
      _
    $region5: #{tpu_custom_call.1} parent=1 // pred_fallthru
      _
    // Predicated region
    $region6: #{tpu_custom_call.1} parent=1 // pred_check
      _
    $region7: #{tpu_custom_call.1} parent=1 // pred_check_branch
      %12 = sbr.rel (0) target = $region9
    $region8: #{tpu_custom_call.1} parent=1 // pred_region
      _
    $region9: #{tpu_custom_call.1} parent=1 // pred_fallthru
      _
    // Predicated region
    $region10: #{tpu_custom_call.1} parent=1 // pred_check
      _
    $region11: #{tpu_custom_call.1} parent=1 // pred_check_branch
      %14 = sbr.rel (0) target = $region13
    $region12: #{tpu_custom_call.1} parent=1 // pred_region
      _
    $region13: #{tpu_custom_call.1} parent=1 // pred_fallthru
      _
    %v15 = vld [vmem:[%s0] sm:$0x3]
    %v16 = vld [vmem:[%s1] sm:$0xff]
    %v17 = vld [vmem:[%s1 + $0x8] sm:$0xff]
    %v18 = vld [vmem:[%s1 + $0x10] sm:$0xff]
    %v19 = vld [vmem:[%s1 + $0x18] sm:$0xff]
    %v20 = vld [vmem:[%s2] sm:$0x1]
    %v22 = vlaneseq
    %v23 = vshrl.u32 %v22, 7
    %v24 = vsub.s32 0, %v23
    %v25 = vrot.slane %v20, %v24
    %vm27 = vcmask 261120
    %v29 = vsel %vm27, %v15, 0
    %31 = vmatprep.subr.mxu0 0.0
    %32 = vmatpush1.msra.mxu0 %v16
    %33 = vmatprep.subr.mxu0 0.0
    %34 = vmatpush1.msra.mxu0 %v17
    %35 = vmatprep.subr.mxu0 0.0
    %36 = vmatpush1.msra.mxu0 %v18
    %37 = vmatprep.subr.mxu0 0.0
    %38 = vmatpush1.msra.mxu0 %v19
    %39 = vmatprep.subr.mxu0 0.0
    %40 = vmatpush1.msra.mxu0 0.0
    %41 = vmatprep.subr.mxu0 0.0
    %42 = vmatpush1.msra.mxu0 0.0
    %43 = vmatprep.subr.mxu0 0.0
    %44 = vmatpush1.msra.mxu0 0.0
    %45 = vmatprep.subr.mxu0 0.0
    %46 = vmatpush1.msra.mxu0 0.0
    %47 = vmatprep.subr.mxu0 0.0
    %48 = vmatpush1.msra.mxu0 0.0
    %49 = vmatprep.subr.mxu0 0.0
    %50 = vmatpush1.msra.mxu0 0.0
    %51 = vmatprep.subr.mxu0 0.0
    %52 = vmatpush1.msra.mxu0 0.0
    %53 = vmatprep.subr.mxu0 0.0
    %54 = vmatpush1.msra.mxu0 0.0
    %55 = vmatprep.subr.mxu0 0.0
    %56 = vmatpush1.msra.mxu0 0.0
    %57 = vmatprep.subr.mxu0 0.0
    %58 = vmatpush1.msra.mxu0 0.0
    %59 = vmatprep.subr.mxu0 0.0
    %60 = vmatpush1.msra.mxu0 0.0
    %61 = vmatprep.subr.mxu0 0.0
    %62 = vmatpush1.msra.mxu0 0.0
    %63 = vmatprep.subr.mxu0 0.0
    %64 = vmatpush1.msra.mxu0 0.0
    %65 = vmatprep.subr.mxu0 0.0
    %66 = vmatpush1.msra.mxu0 0.0
    %67 = vmatprep.subr.mxu0 0.0
    %68 = vmatpush1.msra.mxu0 0.0
    %69 = vmatprep.subr.mxu0 0.0
    %70 = vmatpush1.msra.mxu0 0.0
    %71 = vmatprep.subr.mxu0 0.0
    %72 = vmatpush1.msra.mxu0 0.0
    %73 = vmatprep.subr.mxu0 0.0
    %74 = vmatpush1.msra.mxu0 0.0
    %75 = vmatprep.subr.mxu0 0.0
    %76 = vmatpush1.msra.mxu0 0.0
    %77 = vmatprep.subr.mxu0 0.0
    %78 = vmatpush1.msra.mxu0 0.0
    %79 = vmatprep.subr.mxu0 0.0
    %80 = vmatpush1.msra.mxu0 0.0
    %81 = vmatprep.subr.mxu0 0.0
    %82 = vmatpush1.msra.mxu0 0.0
    %83 = vmatprep.subr.mxu0 0.0
    %84 = vmatpush1.msra.mxu0 0.0
    %85 = vmatprep.subr.mxu0 0.0
    %86 = vmatpush1.msra.mxu0 0.0
    %87 = vmatprep.subr.mxu0 0.0
    %88 = vmatpush1.msra.mxu0 0.0
    %89 = vmatprep.subr.mxu0 0.0
    %90 = vmatpush1.msra.mxu0 0.0
    %91 = vmatprep.subr.mxu0 0.0
    %92 = vmatpush1.msra.mxu0 0.0
    %93 = vmatprep.subr.mxu0 0.0
    %94 = vmatpush1.msra.mxu0 0.0
    %95 = vmatprep.mubr.f32.mxu0 0.0
    %96 = vmatmul.mubr.f32.gmra.mrb[0].mxu0 %v29
    %v97 = vpop.f32.mrb[0].mxu0
    %v98 = vadd.f32 %v25, %v97
    %v99 = vpop.f32.mrb[0].mxu0
    %100 = vdwg.mxu0
    %vm101 = vcmask 58368
    %102 = vst.msk [vmem:[#allocation2] sm:$0x3] %vm101, %v98
    // Predicated region
    $region14: #{tpu_custom_call.1} parent=1 // pred_check
      _
    $region15: #{tpu_custom_call.1} parent=1 // pred_check_branch
      %104 = sbr.rel (0) target = $region17
    $region16: #{tpu_custom_call.1} parent=1 // pred_region
      %s106 = ssub.s32 32, 32
      %107 = vsyncadd [#allocation3], %s106
      %s109 = sshll.u32 [#allocation2], 4
      %s110 = int_to_ptr.vmem [resolvable:$true] %s109
      %112 = dma.vmem_to_hbm [thread:$0]  %s110, 32, %s3, [#allocation3]
    $region17: #{tpu_custom_call.1} parent=1 // pred_fallthru
      _
    // Predicated region
    $region18: #{tpu_custom_call.1} parent=1 // pred_check
      _
    $region19: #{tpu_custom_call.1} parent=1 // pred_check_branch
      %114 = sbr.rel (0) target = $region21
    $region20: #{tpu_custom_call.1} parent=1 // pred_region
      %115 = dma.done [#allocation3], 32
    $region21: #{tpu_custom_call.1} parent=1 // pred_fallthru
      _
    %116 = vsyncpa [#allocation3], 1

</llo_original>
